<compile_context>
chip_gen: v7x
topology: tpu7x:2x2x1
jax: 0.10.0
libtpu: 0.0.40
codegen_flags: <defaults>
</compile_context>

<pallas_src>
import functools
import math

import jax
import jax.numpy as jnp
from jax.experimental import pallas as pl
from jax.experimental.pallas import tpu as pltpu


def _round_up(x, m):
    return (x + m - 1) // m * m


def _vmem_limit(*buffer_bytes):
    # Double-buffered pipelining of every buffer + headroom for Mosaic's own
    # scratch; clamp to stay well under v7x's 64 MiB physical VMEM.
    need = 2 * sum(buffer_bytes) + (8 << 20)
    return int(min(max(need, 16 << 20), 56 << 20))


# --------------------------- channels_last kernel -----------------------------

def _ln_channels_last_kernel(x_ref, w_ref, b_ref, o_ref, *, eps, c_real):
    """(TM, Cp) row tile, normalize over the lane (channel) axis.

    When Cp > c_real the padded lanes hold zeros; statistics are masked to the
    real channel count so padding never perturbs mean/var.
    """
    x = x_ref[...].astype(jnp.float32)                         # (TM, Cp)
    cp = x.shape[-1]
    if cp == c_real:                                            # lane-dense fast path
        mu = jnp.mean(x, axis=-1, keepdims=True)
        xc = x - mu
        var = jnp.mean(xc * xc, axis=-1, keepdims=True)
    else:
        lane = jax.lax.broadcasted_iota(jnp.int32, x.shape, x.ndim - 1)
        mask = (lane < c_real).astype(jnp.float32)
        inv_c = 1.0 / float(c_real)
        mu = jnp.sum(x * mask, axis=-1, keepdims=True) * inv_c
        xc = (x - mu) * mask
        var = jnp.sum(xc * xc, axis=-1, keepdims=True) * inv_c
    y = xc * jax.lax.rsqrt(var + eps) * w_ref[...] + b_ref[...]
    o_ref[...] = y.astype(o_ref.dtype)


def _layer_norm_channels_last(x, weight, bias, eps):
    C = x.shape[-1]
    lead = x.shape[:-1]
    M = int(math.prod(lead)) if lead else 1

    Cp = _round_up(C, 128)                       # lane-dense channel axis
    xf = x.reshape(M, C)
    if Cp != C:
        xf = jnp.pad(xf, ((0, 0), (0, Cp - C)))

    tm = min(1024, _round_up(M, 8))              # large row tile (HBM-bound op)
    Mp = _round_up(M, tm)
    if Mp != M:
        xf = jnp.pad(xf, ((0, Mp - M), (0, 0)))

    w = jnp.pad(weight.reshape(1, C).astype(jnp.float32), ((0, 0), (0, Cp - C)))
    b = jnp.pad(bias.reshape(1, C).astype(jnp.float32), ((0, 0), (0, Cp - C)))

    tile_bytes = tm * Cp * jnp.dtype(x.dtype).itemsize
    vmem = _vmem_limit(tile_bytes, tile_bytes, 2 * Cp * 4)

    out = pl.pallas_call(
        functools.partial(_ln_channels_last_kernel, eps=eps, c_real=C),
        grid=(Mp // tm,),
        out_shape=jax.ShapeDtypeStruct((Mp, Cp), x.dtype),
        in_specs=[pl.BlockSpec((tm, Cp), lambda i: (i, 0)),
                  pl.BlockSpec((1, Cp), lambda i: (0, 0)),
                  pl.BlockSpec((1, Cp), lambda i: (0, 0))],
        out_specs=pl.BlockSpec((tm, Cp), lambda i: (i, 0)),
        compiler_params=pltpu.CompilerParams(
            dimension_semantics=("parallel",),
            vmem_limit_bytes=vmem),
    )(xf, w, b)
    return out[:M, :C].reshape(*lead, C)


# --------------------------- channels_first kernel ----------------------------

def _ln_channels_first_kernel(x_ref, w_ref, b_ref, o_ref, *, eps, c_real):
    """(1, Cp, TS) tile with the flattened spatial axis on the lanes; normalize
    over the SUBLANE (channel) axis, so no transposes are needed around the
    kernel (matches the PyTorch channels_first branch exactly)."""
    x = x_ref[0].astype(jnp.float32)                            # (Cp, TS)
    cp = x.shape[0]
    if cp == c_real:
        mu = jnp.mean(x, axis=0, keepdims=True)
        xc = x - mu
        var = jnp.mean(xc * xc, axis=0, keepdims=True)
    else:
        sub = jax.lax.broadcasted_iota(jnp.int32, x.shape, 0)
        mask = (sub < c_real).astype(jnp.float32)
        inv_c = 1.0 / float(c_real)
        mu = jnp.sum(x * mask, axis=0, keepdims=True) * inv_c
        xc = (x - mu) * mask
        var = jnp.sum(xc * xc, axis=0, keepdims=True) * inv_c
    y = xc * jax.lax.rsqrt(var + eps) * w_ref[...] + b_ref[...]
    o_ref[0] = y.astype(o_ref.dtype)


def _layer_norm_channels_first(x, weight, bias, eps):
    N, C = x.shape[0], x.shape[1]
    spatial = x.shape[2:]
    S = int(math.prod(spatial)) if spatial else 1
    x3 = x.reshape(N, C, S)

    Cp = _round_up(C, 8)                         # sublane-aligned channel axis
    ts = min(2048, _round_up(S, 128))            # lane-dense spatial tile
    Sp = _round_up(S, ts)
    pad_c, pad_s = Cp - C, Sp - S
    if pad_c or pad_s:
        x3 = jnp.pad(x3, ((0, 0), (0, pad_c), (0, pad_s)))

    w = jnp.pad(weight.reshape(C, 1).astype(jnp.float32), ((0, pad_c), (0, 0)))
    b = jnp.pad(bias.reshape(C, 1).astype(jnp.float32), ((0, pad_c), (0, 0)))

    tile_bytes = Cp * ts * jnp.dtype(x.dtype).itemsize
    vmem = _vmem_limit(tile_bytes, tile_bytes, 2 * Cp * 4)

    out = pl.pallas_call(
        functools.partial(_ln_channels_first_kernel, eps=eps, c_real=C),
        grid=(N, Sp // ts),
        out_shape=jax.ShapeDtypeStruct((N, Cp, Sp), x.dtype),
        in_specs=[pl.BlockSpec((1, Cp, ts), lambda n, s: (n, 0, s)),
                  pl.BlockSpec((Cp, 1), lambda n, s: (0, 0)),
                  pl.BlockSpec((Cp, 1), lambda n, s: (0, 0))],
        out_specs=pl.BlockSpec((1, Cp, ts), lambda n, s: (n, 0, s)),
        compiler_params=pltpu.CompilerParams(
            dimension_semantics=("parallel", "parallel"),
            vmem_limit_bytes=vmem),
    )(x3, w, b)
    return out[:, :C, :S].reshape(N, C, *spatial)


def layer_norm(x, weight, bias, *, eps=1e-6, data_format="channels_last"):
    """Pallas LayerNorm over the channel axis (the spec'd PyTorch module)."""
    if data_format == "channels_last":
        return _layer_norm_channels_last(x, weight, bias, eps)
    if data_format == "channels_first":
        return _layer_norm_channels_first(x, weight, bias, eps)
    raise NotImplementedError(data_format)


# ----------------------------------- main --------------------------------------

if __name__ == "__main__":
    key = jax.random.PRNGKey(0)
    k1, k2, k3, k4 = jax.random.split(key, 4)

    # ---- channels_first: (batch, channels, H, W), like the PyTorch module ----
    N, C, H, W = 2, 4, 16, 16
    x_cf = jax.random.normal(k1, (N, C, H, W), jnp.float32)
    w = 1.0 + 0.1 * jax.random.normal(k2, (C,), jnp.float32)
    b = 0.05 * jax.random.normal(k3, (C,), jnp.float32)

    got_cf = jax.block_until_ready(layer_norm(x_cf, w, b, data_format="channels_first"))
    mu = jnp.mean(x_cf, axis=1, keepdims=True)
    var = jnp.mean((x_cf - mu) ** 2, axis=1, keepdims=True)
    ref_cf = (x_cf - mu) / jnp.sqrt(var + 1e-6) * w[None, :, None, None] \
             + b[None, :, None, None]
    err_cf = float(jnp.max(jnp.abs(got_cf - ref_cf)))

    # ---- channels_last: (batch, H, W, channels), C < 128 (masked-stat path) ----
    x_cl = jnp.transpose(x_cf, (0, 2, 3, 1))
    got_cl = jax.block_until_ready(layer_norm(x_cl, w, b, data_format="channels_last"))
    mu = jnp.mean(x_cl, axis=-1, keepdims=True)
    var = jnp.mean((x_cl - mu) ** 2, axis=-1, keepdims=True)
    ref_cl = (x_cl - mu) / jnp.sqrt(var + 1e-6) * w + b
    err_cl = float(jnp.max(jnp.abs(got_cl - ref_cl)))

    # ---- channels_last, lane-dense C=128 bf16 (unmasked fast path) ----
    C2 = 128
    x2 = jax.random.normal(k4, (2, 8, 8, C2), jnp.float32).astype(jnp.bfloat16)
    w2 = jnp.linspace(0.5, 1.5, C2).astype(jnp.float32)
    b2 = jnp.linspace(-0.2, 0.2, C2).astype(jnp.float32)
    got2 = jax.block_until_ready(layer_norm(x2, w2, b2, data_format="channels_last"))
    x2f = x2.astype(jnp.float32)
    mu = jnp.mean(x2f, -1, keepdims=True)
    var = jnp.mean((x2f - mu) ** 2, -1, keepdims=True)
    ref2 = (x2f - mu) / jnp.sqrt(var + 1e-6) * w2 + b2
    err2 = float(jnp.max(jnp.abs(got2.astype(jnp.float32) - ref2)))

    if err_cf > 2e-3 or err_cl > 2e-3 or err2 > 5e-2:
        raise AssertionError(
            f"LayerNorm mismatch: cf={err_cf} cl={err_cl} bf16={err2}")

    print("KERNEL_OK")
</pallas_src>

<mosaic_0001>
module attributes {stable_mosaic.version = 11 : i64} {
  func.func @_ln_channels_first_kernel(%arg0: i32, %arg1: i32, %arg2: memref<1x8x256xf32, #tpu.memory_space<vmem>>, %arg3: memref<8x1xf32, #tpu.memory_space<vmem>>, %arg4: memref<8x1xf32, #tpu.memory_space<vmem>>, %arg5: memref<1x8x256xf32, #tpu.memory_space<vmem>>) attributes {dimension_semantics = [#tpu.dimension_semantics<parallel>, #tpu.dimension_semantics<parallel>], iteration_bounds = array<i64: 2, 1>, scalar_prefetch = 0 : i64, scratch_operands = 0 : i64, tpu.core_type = #tpu.core_type<tc>, window_params = [{transform_indices = @transform_0, window_bounds = array<i64: 1, 8, 256>}, {pipeline_mode = #tpu.pipeline_mode<synchronous>, transform_indices = @transform_1, window_bounds = array<i64: 8, 1>}, {pipeline_mode = #tpu.pipeline_mode<synchronous>, transform_indices = @transform_2, window_bounds = array<i64: 8, 1>}, {transform_indices = @transform_3, window_bounds = array<i64: 1, 8, 256>}]} {
    %c0 = arith.constant 0 : index
    %c0_0 = arith.constant 0 : index
    %c0_1 = arith.constant 0 : index
    %0 = vector.load %arg2[%c0, %c0_0, %c0_1] : memref<1x8x256xf32, #tpu.memory_space<vmem>>, vector<1x8x256xf32>
    %1 = vector.shape_cast %0 : vector<1x8x256xf32> to vector<8x256xf32>
    %2 = tpu.iota {dimensions = array<i32: 0>} : vector<8x256xi32>
    %c4_i32 = arith.constant 4 : i32
    %3 = vector.broadcast %c4_i32 : i32 to vector<8x256xi32>
    %4 = arith.cmpi slt, %2, %3 : vector<8x256xi32>
    %5 = arith.extui %4 : vector<8x256xi1> to vector<8x256xi32>
    %6 = arith.sitofp %5 : vector<8x256xi32> to vector<8x256xf32>
    %7 = arith.mulf %1, %6 : vector<8x256xf32>
    %cst = arith.constant dense<0.000000e+00> : vector<256xf32>
    %8 = vector.multi_reduction <add>, %7, %cst [0] : vector<8x256xf32> to vector<256xf32>
    %9 = vector.shape_cast %8 : vector<256xf32> to vector<1x256xf32>
    %cst_2 = arith.constant 2.500000e-01 : f32
    %10 = vector.broadcast %cst_2 : f32 to vector<1x256xf32>
    %11 = arith.mulf %9, %10 : vector<1x256xf32>
    %12 = vector.broadcast %11 : vector<1x256xf32> to vector<8x256xf32>
    %13 = arith.subf %1, %12 : vector<8x256xf32>
    %14 = arith.mulf %13, %6 : vector<8x256xf32>
    %15 = arith.mulf %14, %14 : vector<8x256xf32>
    %cst_3 = arith.constant dense<0.000000e+00> : vector<256xf32>
    %16 = vector.multi_reduction <add>, %15, %cst_3 [0] : vector<8x256xf32> to vector<256xf32>
    %17 = vector.shape_cast %16 : vector<256xf32> to vector<1x256xf32>
    %cst_4 = arith.constant 2.500000e-01 : f32
    %18 = vector.broadcast %cst_4 : f32 to vector<1x256xf32>
    %19 = arith.mulf %17, %18 : vector<1x256xf32>
    %cst_5 = arith.constant 9.99999997E-7 : f32
    %20 = vector.broadcast %cst_5 : f32 to vector<1x256xf32>
    %21 = arith.addf %19, %20 : vector<1x256xf32>
    %22 = math.rsqrt %21 : vector<1x256xf32>
    %23 = vector.broadcast %22 : vector<1x256xf32> to vector<8x256xf32>
    %24 = arith.mulf %14, %23 : vector<8x256xf32>
    %c0_6 = arith.constant 0 : index
    %c0_7 = arith.constant 0 : index
    %25 = vector.load %arg3[%c0_6, %c0_7] : memref<8x1xf32, #tpu.memory_space<vmem>>, vector<8x1xf32>
    %26 = vector.broadcast %25 : vector<8x1xf32> to vector<8x256xf32>
    %27 = arith.mulf %24, %26 : vector<8x256xf32>
    %c0_8 = arith.constant 0 : index
    %c0_9 = arith.constant 0 : index
    %28 = vector.load %arg4[%c0_8, %c0_9] : memref<8x1xf32, #tpu.memory_space<vmem>>, vector<8x1xf32>
    %29 = vector.broadcast %28 : vector<8x1xf32> to vector<8x256xf32>
    %30 = arith.addf %27, %29 : vector<8x256xf32>
    %c0_10 = arith.constant 0 : index
    %c0_11 = arith.constant 0 : index
    %c0_12 = arith.constant 0 : index
    %31 = vector.load %arg5[%c0_10, %c0_11, %c0_12] : memref<1x8x256xf32, #tpu.memory_space<vmem>>, vector<1x8x256xf32>
    %32 = vector.shape_cast %31 : vector<1x8x256xf32> to vector<8x256xf32>
    %33 = vector.shape_cast %30 : vector<8x256xf32> to vector<1x8x256xf32>
    tpu.vector_store %arg5[%c0_10, %c0_11, %c0_12], %33 {strides = array<i32>} : memref<1x8x256xf32, #tpu.memory_space<vmem>>, vector<1x8x256xf32>,
    return
  }
  func.func @transform_0(%arg0: i32, %arg1: i32) -> (i32, i32, i32) {
    %c0_i32 = arith.constant 0 : i32
    %c0_i32_0 = arith.constant 0 : i32
    return %arg0, %c0_i32, %arg1 : i32, i32, i32
  }
  func.func @transform_1(%arg0: i32, %arg1: i32) -> (i32, i32) {
    %c0_i32 = arith.constant 0 : i32
    %c0_i32_0 = arith.constant 0 : i32
    %c0_i32_1 = arith.constant 0 : i32
    return %c0_i32, %c0_i32_0 : i32, i32
  }
  func.func @transform_2(%arg0: i32, %arg1: i32) -> (i32, i32) {
    %c0_i32 = arith.constant 0 : i32
    %c0_i32_0 = arith.constant 0 : i32
    %c0_i32_1 = arith.constant 0 : i32
    return %c0_i32, %c0_i32_0 : i32, i32
  }
  func.func @transform_3(%arg0: i32, %arg1: i32) -> (i32, i32, i32) {
    %c0_i32 = arith.constant 0 : i32
    %c0_i32_0 = arith.constant 0 : i32
    return %arg0, %c0_i32, %arg1 : i32, i32, i32
  }
}

</mosaic_0001>

<llo_original>
// kernel: tpu_custom_call.1
$region0: #{tpu_custom_call.1}
  #allocation0 [shape = 'u32[]', space=smem, size = 0x4, offset = 0x4, fixed_abs, tag = 'smem constant byte address 0x4 - core index']
  #allocation1 [shape = 'u32[144,128]{1,0:T(1,128)}', space=vmem, size = 0x12000, scoped, tag = 'internal scratch']
  %s0 = inlined_call_operand.hbm [shape: f32[2,8,256], index: 0, kind: input, shape index: {}]
  %s1 = inlined_call_operand.vmem [shape: f32[8,1], index: 1, kind: input, shape index: {}]
  %s2 = inlined_call_operand.vmem [shape: f32[8,1], index: 2, kind: input, shape index: {}]
  %s3 = inlined_call_operand.hbm [shape: f32[2,8,256], index: 3, kind: output, shape index: {}]
  %s4 = sld [smem:[#allocation0]]
  $region49: #{tpu_custom_call.1} parent=0
    _
  %s6 = ssub.s32 1, %s4
  %s7 = scalar_select 0, %s6, %s4
  $region1: #{tpu_custom_call.1} parent=0
    #allocation2 [shape = 'u8[16384]{0}', space=vmem, size = 0x4000, scoped, tag = 'input window, operand 0']
    #allocation3 [shape = 's32[2]{0}', space=sflag, size = 0x8, scoped, tag = 'scoped memory for tpu_custom_call.1']
    #allocation4 [shape = 's32[2]{0}', space=sflag, size = 0x8, scoped, tag = 'scoped memory for tpu_custom_call.1']
    #allocation5 [shape = 'u8[16384]{0}', space=vmem, size = 0x4000, scoped, tag = 'output window, operand 0']
    %8 = vsyncpa [#allocation3], 0
    %s9 = scalar_lea.sflag [#allocation3], 1
    %10 = vsyncpa %s9, 0
    %11 = vsyncpa [#allocation4], 0
    %s12 = scalar_lea.sflag [#allocation4], 1
    %13 = vsyncpa %s12, 0
    loop: start=0, step=1, limit=4
    $region2: #{tpu_custom_call.1} parent=1 // loop_pre_header
      _
    $region3: #{tpu_custom_call.1} parent=1 // loop_header
      %s15 = sphi 0, %s19
      %p16 = scmp.ge.s32.totalorder %s15, 4
      %s22 = sphi 0, %s34
      %s23 = sphi 0, %s30
      %s24 = sphi 0, %s22
      %s25 = sphi 0, %s23
      %s26 = sphi 0, %s24
      %s27 = sphi 0, %s25
      %s39 = sphi 0, %s41
      %s42 = sphi 0, %s39
      %s43 = sphi 0, %s42
      %s59 = sphi 0, %s43
      %s63 = sphi 0, %s63
      %s65 = sphi 0, %s63
      %s66 = sphi 0, %s65
      %s80 = sphi 0, %s66
      %s84 = sphi 0, %s84
      %s86 = sphi 0, %s84
      %s87 = sphi 0, %s86
      %s101 = sphi 0, %s87
      %s109 = sphi 0, %s111
      %s112 = sphi 0, %s109
      %s113 = sphi 0, %s112
      %s129 = sphi 0, %s113
    $region4: #{tpu_custom_call.1} parent=1 // loop_header_branch
      %18 = sbr.rel (%p16) target = $region8
    $region5: #{tpu_custom_call.1} parent=1 // loop_body
      %s20 = ssub.s32 %s15, 1
      %s21 = ssub.s32 %s15, 2
      %s28 = sadd.s32 1, %s23
      %p29 = scmp.ge.s32.totalorder %s28, 1
      %s30 = scalar_select %p29, 0, %s28
      %s31 = sadd.s32 1, %s22
      %s32 = scalar_select %p29, %s31, %s22
      %p33 = scmp.ge.s32.totalorder %s32, 2
      %s34 = scalar_select %p33, 0, %s32
      %s35 = ssub.s32 %s22, %s34
      %s36 = ssub.s32 %s23, %s30
      %s37 = sor.u32 %s35, %s36
      %p38 = scmp.eq.s32.totalorder %s37, 0
      %s40 = sadd.s32 %s39, 1
      %s41 = scalar_select %p38, %s39, %s40
      %p44 = pneg %p38
      %p45 = scmp.eq.s32.totalorder %s15, 1
      %p46 = por %p44, %p45
      %p47 = scmp.ne.s32.totalorder %s39, %s42
      %p48 = scmp.eq.s32.totalorder %s15, 0
      %p49 = por %p47, %p48
      %p50 = scmp.ne.s32.totalorder %s39, %s42
      %p51 = scmp.eq.s32.totalorder %s20, 1
      %p52 = por %p50, %p51
      %p53 = scmp.ne.s32.totalorder %s42, %s43
      %p54 = scmp.eq.s32.totalorder %s20, 0
      %p55 = por %p53, %p54
      %p56 = scmp.ne.s32.totalorder %s42, %s43
      %p57 = scmp.eq.s32.totalorder %s21, 1
      %p58 = por %p56, %p57
      %p60 = scmp.ne.s32.totalorder %s43, %s59
      %p61 = scmp.eq.s32.totalorder %s21, 0
      %p62 = por %p60, %p61
      %s64 = sadd.s32 %s63, 1
      %p67 = scmp.eq.s32.totalorder %s15, 1
      %p68 = scmp.ne.s32.totalorder %s63, %s65
      %p69 = scmp.eq.s32.totalorder %s15, 0
      %p70 = por %p68, %p69
      %p71 = scmp.ne.s32.totalorder %s63, %s65
      %p72 = scmp.eq.s32.totalorder %s20, 1
      %p73 = por %p71, %p72
      %p74 = scmp.ne.s32.totalorder %s65, %s66
      %p75 = scmp.eq.s32.totalorder %s20, 0
      %p76 = por %p74, %p75
      %p77 = scmp.ne.s32.totalorder %s65, %s66
      %p78 = scmp.eq.s32.totalorder %s21, 1
      %p79 = por %p77, %p78
      %p81 = scmp.ne.s32.totalorder %s66, %s80
      %p82 = scmp.eq.s32.totalorder %s21, 0
      %p83 = por %p81, %p82
      %s85 = sadd.s32 %s84, 1
      %p88 = scmp.eq.s32.totalorder %s15, 1
      %p89 = scmp.ne.s32.totalorder %s84, %s86
      %p90 = scmp.eq.s32.totalorder %s15, 0
      %p91 = por %p89, %p90
      %p92 = scmp.ne.s32.totalorder %s84, %s86
      %p93 = scmp.eq.s32.totalorder %s20, 1
      %p94 = por %p92, %p93
      %p95 = scmp.ne.s32.totalorder %s86, %s87
      %p96 = scmp.eq.s32.totalorder %s20, 0
      %p97 = por %p95, %p96
      %p98 = scmp.ne.s32.totalorder %s86, %s87
      %p99 = scmp.eq.s32.totalorder %s21, 1
      %p100 = por %p98, %p99
      %p102 = scmp.ne.s32.totalorder %s87, %s101
      %p103 = scmp.eq.s32.totalorder %s21, 0
      %p104 = por %p102, %p103
      %s105 = ssub.s32 %s22, %s34
      %s106 = ssub.s32 %s23, %s30
      %s107 = sor.u32 %s105, %s106
      %p108 = scmp.eq.s32.totalorder %s107, 0
      %s110 = sadd.s32 %s109, 1
      %s111 = scalar_select %p108, %s109, %s110
      %p114 = pneg %p108
      %p115 = scmp.eq.s32.totalorder %s15, 1
      %p116 = por %p114, %p115
      %p117 = scmp.ne.s32.totalorder %s109, %s112
      %p118 = scmp.eq.s32.totalorder %s15, 0
      %p119 = por %p117, %p118
      %p120 = scmp.ne.s32.totalorder %s109, %s112
      %p121 = scmp.eq.s32.totalorder %s20, 1
      %p122 = por %p120, %p121
      %p123 = scmp.ne.s32.totalorder %s112, %s113
      %p124 = scmp.eq.s32.totalorder %s20, 0
      %p125 = por %p123, %p124
      %p126 = scmp.ne.s32.totalorder %s112, %s113
      %p127 = scmp.eq.s32.totalorder %s21, 1
      %p128 = por %p126, %p127
      %p130 = scmp.ne.s32.totalorder %s113, %s129
      %p131 = scmp.eq.s32.totalorder %s21, 0
      %p132 = por %p130, %p131
      %p133 = scmp.le.s32.totalorder 1, %s15
      %p134 = scmp.lt.s32.totalorder %s15, 3
      %p135 = pnand %p133, %p134
      %p136 = pneg %p135
      // Predicated region
      $region9: #{tpu_custom_call.1} parent=5 // pred_check
        _
      $region10: #{tpu_custom_call.1} parent=5 // pred_check_branch
        %138 = sbr.rel (%p135) target = $region12
      $region11: #{tpu_custom_call.1} parent=5 // pred_region
        %s139 = ssub.s32 %s15, 1
        // Predicated region
        $region13: #{tpu_custom_call.1} parent=11 // pred_check
          %p140 = pneg %p76
        $region14: #{tpu_custom_call.1} parent=11 // pred_check_branch
          %142 = sbr.rel (%p140) target = $region16
        $region15: #{tpu_custom_call.1} parent=11 // pred_region
          _
        $region16: #{tpu_custom_call.1} parent=11 // pred_fallthru
          _
        // Predicated region
        $region17: #{tpu_custom_call.1} parent=11 // pred_check
          %p143 = pneg %p97
        $region18: #{tpu_custom_call.1} parent=11 // pred_check_branch
          %145 = sbr.rel (%p143) target = $region20
        $region19: #{tpu_custom_call.1} parent=11 // pred_region
          _
        $region20: #{tpu_custom_call.1} parent=11 // pred_fallthru
          _
      $region12: #{tpu_custom_call.1} parent=5 // pred_fallthru
        _
      %p146 = scmp.lt.s32.totalorder %s15, 2
      // Predicated region
      $region21: #{tpu_custom_call.1} parent=5 // pred_check
        %p147 = pneg %p146
      $region22: #{tpu_custom_call.1} parent=5 // pred_check_branch
        %149 = sbr.rel (%p147) target = $region24
      $region23: #{tpu_custom_call.1} parent=5 // pred_region
        // Predicated region
        $region25: #{tpu_custom_call.1} parent=23 // pred_check
          %p150 = pneg %p49
        $region26: #{tpu_custom_call.1} parent=23 // pred_check_branch
          %152 = sbr.rel (%p150) target = $region28
        $region27: #{tpu_custom_call.1} parent=23 // pred_region
          %s153 = sand.u32 %s39, 1
          %s154 = scalar_lea.sflag [#allocation3], %s153
          %s155 = sand.u32 %s39, 1
          %s156 = smul.addr %s155, 16
          %s157 = scalar_lea.vmem [#allocation2], %s156
          %s158 = smul.u32 2, %s23
          %s160 = ssub.s32 256, 256
          %161 = vsyncadd %s154, %s160
          %s162 = smul.addr %s22, 2
          %s163 = sadd.s32 %s158, %s162
          %s164 = smul.addr %s163, 128
          %s165 = scalar_lea.hbm %s0, %s164
          %s167 = sshll.u32 %s157, 4
          %s168 = int_to_ptr.vmem [resolvable:$true] %s167
          %170 = dma.hbm_to_vmem [thread:$0]  %s165, 256, %s168, %s154
        $region28: #{tpu_custom_call.1} parent=23 // pred_fallthru
          _
      $region24: #{tpu_custom_call.1} parent=5 // pred_fallthru
        _
      %p171 = scmp.le.s32.totalorder 1, %s15
      %p172 = scmp.lt.s32.totalorder %s15, 3
      %p173 = pnand %p171, %p172
      %p174 = pneg %p173
      // Predicated region
      $region29: #{tpu_custom_call.1} parent=5 // pred_check
        _
      $region30: #{tpu_custom_call.1} parent=5 // pred_check_branch
        %176 = sbr.rel (%p173) target = $region32
      $region31: #{tpu_custom_call.1} parent=5 // pred_region
        %s177 = ssub.s32 %s15, 1
        %s178 = sand.u32 %s42, 1
        %s179 = scalar_lea.sflag [#allocation3], %s178
        %s180 = sand.u32 %s42, 1
        %s181 = smul.addr %s180, 16
        %s182 = scalar_lea.vmem [#allocation2], %s181
        // Predicated region
        $region33: #{tpu_custom_call.1} parent=31 // pred_check
          %p183 = pneg %p55
        $region34: #{tpu_custom_call.1} parent=31 // pred_check_branch
          %185 = sbr.rel (%p183) target = $region36
        $region35: #{tpu_custom_call.1} parent=31 // pred_region
          %186 = dma.done %s179, 256
        $region36: #{tpu_custom_call.1} parent=31 // pred_fallthru
          _
        %s187 = sand.u32 %s42, 1
        %s188 = scalar_lea.sflag [#allocation3], %s187
        %s189 = sand.u32 %s42, 1
        %s190 = smul.addr %s189, 16
        %s191 = scalar_lea.vmem [#allocation2], %s190
        %p192 = pneg %p55
        %p193 = pneg %p52
        %p194 = pneg %p76
        %p195 = pneg %p73
        %p196 = pneg %p97
        %p197 = pneg %p94
        %p198 = pneg %p125
        %p199 = pneg %p122
        %s200 = sand.u32 %s112, 1
        %s201 = scalar_lea.sflag [#allocation4], %s200
        %s202 = sand.u32 %s112, 1
        %s203 = smul.addr %s202, 16
        %s204 = scalar_lea.vmem [#allocation5], %s203
        %s205 = smul.u32 2, %s25
        %s206 = smul.u32 2, %s25
        %v207 = vld [vmem:[%s182] sm:$0xff]
        %v208 = vld [vmem:[%s182 + $0x8] sm:$0xff]
        %v209 = vlaneseq
        %v210 = vshrl.u32 %v209, 7
        %vm211 = vcmp.lt.s32.totalorder %v210, 4
        %v212 = vsel %vm211, 1, 0
        %v213 = vcvt.s32.f32 %v212
        %v214 = vmul.f32 %v207, %v213
        %v215 = vmul.f32 %v208, %v213
        %v216 = vrot.slane %v214, 4
        %v217 = vadd.f32 %v214, %v216
        %v218 = vrot.slane %v217, 2
        %v219 = vadd.f32 %v217, %v218
        %v220 = vrot.slane %v219, 1
        %v221 = vadd.f32 %v219, %v220
        %v222 = vrot.slane %v215, 4
        %v223 = vadd.f32 %v215, %v222
        %v224 = vrot.slane %v223, 2
        %v225 = vadd.f32 %v223, %v224
        %v226 = vrot.slane %v225, 1
        %v227 = vadd.f32 %v225, %v226
        %v228 = vmul.f32 %v221, 0.25
        %v229 = vmul.f32 %v227, 0.25
        %v230 = vsub.f32 %v207, %v228
        %v231 = vsub.f32 %v208, %v229
        %v232 = vmul.f32 %v230, %v213
        %v233 = vmul.f32 %v231, %v213
        %v234 = vmul.f32 %v232, %v232
        %v235 = vmul.f32 %v233, %v233
        %v236 = vrot.slane %v234, 4
        %v237 = vadd.f32 %v234, %v236
        %v238 = vrot.slane %v237, 2
        %v239 = vadd.f32 %v237, %v238
        %v240 = vrot.slane %v239, 1
        %v241 = vadd.f32 %v239, %v240
        %v242 = vrot.slane %v235, 4
        %v243 = vadd.f32 %v235, %v242
        %v244 = vrot.slane %v243, 2
        %v245 = vadd.f32 %v243, %v244
        %v246 = vrot.slane %v245, 1
        %v247 = vadd.f32 %v245, %v246
        %v248 = vmul.f32 %v241, 0.25
        %v249 = vmul.f32 %v247, 0.25
        %v250 = vadd.f32 %v248, 1e-06
        %v251 = vadd.f32 %v249, 1e-06
        %v252 = vrsqrt.pop %v250
        %v253 = vrsqrt.pop %v251
        %v254 = vmul.f32 %v232, %v252
        %v255 = vmul.f32 %v233, %v253
        %v256 = vld [vmem:[%s1] sm:$0xff]
        %258 = vset.pattern.permute.xlu0 0
        %259 = vperm.xlu0 %258, %v256
        %v260 = vpop.permute.xlu0 %259
        %v262 = vmul.f32 %v254, %v260
        %v263 = vmul.f32 %v255, %v260
        %v264 = vld [vmem:[%s2] sm:$0xff]
        %266 = vset.pattern.permute.xlu0 0
        %267 = vperm.xlu0 %266, %v264
        %v268 = vpop.permute.xlu0 %267
        %v270 = vadd.f32 %v262, %v268
        %v271 = vadd.f32 %v263, %v268
        %272 = vst [vmem:[%s204] sm:$0xff] %v270
        %273 = vst [vmem:[%s204 + $0x8] sm:$0xff] %v271
        %s274 = sand.u32 %s112, 1
        %s275 = scalar_lea.sflag [#allocation4], %s274
        %s276 = sand.u32 %s112, 1
        %s277 = smul.addr %s276, 16
        %s278 = scalar_lea.vmem [#allocation5], %s277
        // Predicated region
        $region37: #{tpu_custom_call.1} parent=31 // pred_check
          %p279 = pneg %p122
        $region38: #{tpu_custom_call.1} parent=31 // pred_check_branch
          %281 = sbr.rel (%p279) target = $region40
        $region39: #{tpu_custom_call.1} parent=31 // pred_region
          %s282 = smul.u32 2, %s25
          %s284 = ssub.s32 256, 256
          %285 = vsyncadd %s275, %s284
          %s286 = smul.addr %s24, 2
          %s287 = sadd.s32 %s282, %s286
          %s288 = smul.addr %s287, 128
          %s289 = scalar_lea.hbm %s3, %s288
          %s291 = sshll.u32 %s278, 4
          %s292 = int_to_ptr.vmem [resolvable:$true] %s291
          %294 = dma.vmem_to_hbm [thread:$0]  %s292, 256, %s289, %s275
        $region40: #{tpu_custom_call.1} parent=31 // pred_fallthru
          _
      $region32: #{tpu_custom_call.1} parent=5 // pred_fallthru
        _
      %p295 = scmp.le.s32.totalorder 2, %s15
      // Predicated region
      $region41: #{tpu_custom_call.1} parent=5 // pred_check
        %p296 = pneg %p295
      $region42: #{tpu_custom_call.1} parent=5 // pred_check_branch
        %298 = sbr.rel (%p296) target = $region44
      $region43: #{tpu_custom_call.1} parent=5 // pred_region
        %s299 = ssub.s32 %s15, 2
        // Predicated region
        $region45: #{tpu_custom_call.1} parent=43 // pred_check
          %p300 = pneg %p128
        $region46: #{tpu_custom_call.1} parent=43 // pred_check_branch
          %302 = sbr.rel (%p300) target = $region48
        $region47: #{tpu_custom_call.1} parent=43 // pred_region
          %s303 = sand.u32 %s113, 1
          %s304 = scalar_lea.sflag [#allocation4], %s303
          %s305 = sand.u32 %s113, 1
          %s306 = smul.addr %s305, 16
          %s307 = scalar_lea.vmem [#allocation5], %s306
          %308 = dma.done %s304, 256
        $region48: #{tpu_custom_call.1} parent=43 // pred_fallthru
          _
      $region44: #{tpu_custom_call.1} parent=5 // pred_fallthru
        _
    $region6: #{tpu_custom_call.1} parent=1 // loop_footer
      %s19 = sadd.s32 1, %s15
    $region7: #{tpu_custom_call.1} parent=1 // loop_footer_branch
      %14 = sbr.rel target = $region3
    $region8: #{tpu_custom_call.1} parent=1 // loop_exit
      _
    %309 = vsyncpa [#allocation3], 1
    %s310 = scalar_lea.sflag [#allocation3], 1
    %311 = vsyncpa %s310, 1
    %312 = vsyncpa [#allocation4], 1
    %s313 = scalar_lea.sflag [#allocation4], 1
    %314 = vsyncpa %s313, 1

</llo_original>
